<compile_context>
chip_gen: v5e
topology: v5e:2x2
jax: 0.10.0
libtpu: 0.0.40
codegen_flags: <defaults>
</compile_context>

<pallas_src>
import jax
import jax.numpy as jnp
from jax.experimental import pallas as pl
from jax.experimental.pallas import tpu as pltpu


def linear_sigmoid_kernel(x_ref, dw_ref, db_ref, o_ref):
    # x_ref: (TB, D) f32   dw_ref: (1, D) f32   db_ref: (1, 1) f32
    # o_ref: (TB, 2) f32
    x = x_ref[...]                                              # already f32
    # z = x @ (w1 - w0) + (b1 - b0): broadcast-mul (VPU) + lane reduce (XLU).
    z = jnp.sum(x * dw_ref[...], axis=-1, keepdims=True) + db_ref[...]   # (TB, 1)
    p1 = jax.nn.sigmoid(z)                                      # EUP transcendental
    # Direct column stores (lane-width-2 output; store path hidden under x DMA).
    o_ref[:, 1:2] = p1.astype(o_ref.dtype)
    o_ref[:, 0:1] = (1.0 - p1).astype(o_ref.dtype)


def _pick_tile_b(batch, d, bytes_per_elem=4, buffer_budget_bytes=12 * 1024 * 1024):
    """Largest multiple-of-32 batch tile whose f32 x-slab fits ~12 MiB/buffer."""
    tb = buffer_budget_bytes // max(1, d * bytes_per_elem)
    tb = max(32, (tb // 32) * 32)
    if batch <= tb:
        # Whole batch fits in one tile. For large batches split into two
        # balanced tiles so both v7x TensorCores get work (no-op on v5e/v6e).
        if batch >= 256:
            half = ((batch + 1) // 2 + 31) // 32 * 32   # ceil(batch/2) to mult of 32
            return min(tb, half)
        return batch          # full-extent block (exempt from divisibility rules)
    return tb


@jax.jit
def linear_depression_forward(x, weight, bias):
    """Pallas equivalent of LinearDepressionModel.forward.

    x:      (B, input_size) float32
    weight: (2, input_size) float32  (PyTorch nn.Linear layout)
    bias:   (2,)            float32
    returns (softmax_probs (B, 2) float32, None)
    """
    B, D = x.shape
    # Fold the 2-class head into a single difference vector, computed in f32
    # BEFORE any cast (avoids cancellation error); hoisted/fused by jit.
    dw = (weight[1].astype(jnp.float32) - weight[0].astype(jnp.float32)).reshape(1, D)
    db = (bias[1].astype(jnp.float32) - bias[0].astype(jnp.float32)).reshape(1, 1)
    x_f32 = x.astype(jnp.float32)    # no-op for f32 inputs; no bf16 round-trip

    TB = _pick_tile_b(B, D)
    grid = (pl.cdiv(B, TB),)

    probs = pl.pallas_call(
        linear_sigmoid_kernel,
        out_shape=jax.ShapeDtypeStruct((B, 2), jnp.float32),
        grid=grid,
        in_specs=[
            pl.BlockSpec((TB, D), lambda i: (i, 0)),   # x tiles, pipelined over batch
            pl.BlockSpec((1, D), lambda i: (0, 0)),    # dw: constant block
            pl.BlockSpec((1, 1), lambda i: (0, 0)),    # db: constant block
        ],
        out_specs=pl.BlockSpec((TB, 2), lambda i: (i, 0)),
        compiler_params=pltpu.CompilerParams(
            dimension_semantics=("parallel",),         # shard batch tiles across TCs (v7x)
            vmem_limit_bytes=48 * 1024 * 1024,         # covers v5e 16 MiB default; < v7x 64 MiB phys
        ),
        cost_estimate=pl.CostEstimate(
            flops=2 * B * D,
            transcendentals=B,
            bytes_accessed=B * D * 4 + B * 2 * 4 + D * 4 + 4,
        ),
    )(x_f32, dw, db)
    return probs, None


if __name__ == "__main__":
    key = jax.random.PRNGKey(0)
    kx, kw, kb = jax.random.split(key, 3)

    batch = 8
    input_size = 32

    x = jax.random.normal(kx, (batch, input_size), dtype=jnp.float32)

    # Deterministic parameter init (xavier-uniform-like weight, uniform bias)
    fan_in, fan_out = input_size, 2
    limit = (6.0 / (fan_in + fan_out)) ** 0.5
    weight = jax.random.uniform(
        kw, (2, input_size), dtype=jnp.float32, minval=-limit, maxval=limit
    )
    bias = jax.random.uniform(kb, (2,), dtype=jnp.float32, minval=0.0, maxval=1.0)

    probs, none_out = linear_depression_forward(x, weight, bias)
    probs = jax.block_until_ready(probs)

    # Sanity check against a plain-JAX f32 reference (f32 end-to-end -> tight tol).
    ref = jax.nn.softmax(x @ weight.T + bias, axis=1)
    assert probs.shape == (batch, 2)
    assert none_out is None
    assert jnp.allclose(probs, ref, atol=1e-5, rtol=1e-5), "mismatch vs reference"

    print("KERNEL_OK")
</pallas_src>

<mosaic_0001>
module attributes {stable_mosaic.version = 11 : i64} {
  func.func @linear_sigmoid_kernel(%arg0: i32, %arg1: memref<8x32xf32, #tpu.memory_space<vmem>>, %arg2: memref<1x32xf32, #tpu.memory_space<vmem>>, %arg3: memref<1x1xf32, #tpu.memory_space<vmem>>, %arg4: memref<8x2xf32, #tpu.memory_space<vmem>>) attributes {dimension_semantics = [#tpu.dimension_semantics<parallel>], iteration_bounds = array<i64: 1>, scalar_prefetch = 0 : i64, scratch_operands = 0 : i64, tpu.core_type = #tpu.core_type<tc>, window_params = [{transform_indices = @transform_0, window_bounds = array<i64: 8, 32>}, {pipeline_mode = #tpu.pipeline_mode<synchronous>, transform_indices = @transform_1, window_bounds = array<i64: 1, 32>}, {pipeline_mode = #tpu.pipeline_mode<synchronous>, transform_indices = @transform_2, window_bounds = array<i64: 1, 1>}, {transform_indices = @transform_3, window_bounds = array<i64: 8, 2>}]} {
    %c0 = arith.constant 0 : index
    %c0_0 = arith.constant 0 : index
    %0 = vector.load %arg1[%c0, %c0_0] : memref<8x32xf32, #tpu.memory_space<vmem>>, vector<8x32xf32>
    %c0_1 = arith.constant 0 : index
    %c0_2 = arith.constant 0 : index
    %1 = vector.load %arg2[%c0_1, %c0_2] : memref<1x32xf32, #tpu.memory_space<vmem>>, vector<1x32xf32>
    %2 = vector.broadcast %1 : vector<1x32xf32> to vector<8x32xf32>
    %3 = arith.mulf %0, %2 : vector<8x32xf32>
    %cst = arith.constant dense<0.000000e+00> : vector<8xf32>
    %4 = vector.multi_reduction <add>, %3, %cst [1] : vector<8x32xf32> to vector<8xf32>
    %5 = vector.shape_cast %4 : vector<8xf32> to vector<8x1xf32>
    %c0_3 = arith.constant 0 : index
    %c0_4 = arith.constant 0 : index
    %6 = vector.load %arg3[%c0_3, %c0_4] : memref<1x1xf32, #tpu.memory_space<vmem>>, vector<1x1xf32>
    %7 = vector.broadcast %6 : vector<1x1xf32> to vector<8x1xf32>
    %8 = arith.addf %5, %7 : vector<8x1xf32>
    %9 = arith.negf %8 : vector<8x1xf32>
    %10 = math.exp %9 : vector<8x1xf32>
    %cst_5 = arith.constant 1.000000e+00 : f32
    %11 = vector.broadcast %cst_5 : f32 to vector<8x1xf32>
    %12 = arith.addf %11, %10 : vector<8x1xf32>
    %13 = arith.divf %11, %12 : vector<8x1xf32>
    %c0_6 = arith.constant 0 : index
    %c1 = arith.constant 1 : index
    %14 = vector.load %arg4[%c0_6, %c1] : memref<8x2xf32, #tpu.memory_space<vmem>>, vector<8x1xf32>
    tpu.vector_store %arg4[%c0_6, %c1], %13 {strides = array<i32>} : memref<8x2xf32, #tpu.memory_space<vmem>>, vector<8x1xf32>,
    %cst_7 = arith.constant 1.000000e+00 : f32
    %15 = vector.broadcast %cst_7 : f32 to vector<8x1xf32>
    %16 = arith.subf %15, %13 : vector<8x1xf32>
    %c0_8 = arith.constant 0 : index
    %c0_9 = arith.constant 0 : index
    %17 = vector.load %arg4[%c0_8, %c0_9] : memref<8x2xf32, #tpu.memory_space<vmem>>, vector<8x1xf32>
    tpu.vector_store %arg4[%c0_8, %c0_9], %16 {strides = array<i32>} : memref<8x2xf32, #tpu.memory_space<vmem>>, vector<8x1xf32>,
    return
  }
  func.func @transform_0(%arg0: i32) -> (i32, i32) {
    %c0_i32 = arith.constant 0 : i32
    %c0_i32_0 = arith.constant 0 : i32
    return %arg0, %c0_i32 : i32, i32
  }
  func.func @transform_1(%arg0: i32) -> (i32, i32) {
    %c0_i32 = arith.constant 0 : i32
    %c0_i32_0 = arith.constant 0 : i32
    %c0_i32_1 = arith.constant 0 : i32
    return %c0_i32, %c0_i32_0 : i32, i32
  }
  func.func @transform_2(%arg0: i32) -> (i32, i32) {
    %c0_i32 = arith.constant 0 : i32
    %c0_i32_0 = arith.constant 0 : i32
    %c0_i32_1 = arith.constant 0 : i32
    return %c0_i32, %c0_i32_0 : i32, i32
  }
  func.func @transform_3(%arg0: i32) -> (i32, i32) {
    %c0_i32 = arith.constant 0 : i32
    %c0_i32_0 = arith.constant 0 : i32
    return %arg0, %c0_i32 : i32, i32
  }
}

</mosaic_0001>

<llo_original>
// kernel: linear_depression_forward.1
$region0: #{linear_depression_forward.1}
  #allocation0 [shape = 'u32[]', space=smem, size = 0x4, offset = 0x4, fixed_abs, tag = 'smem constant byte address 0x4 - core index']
  #allocation1 [shape = 'u32[72,128]{1,0:T(1,128)}', space=vmem, size = 0x9000, scoped, tag = 'internal scratch']
  #allocation2 [shape = 'f32[1,1]{1,0:T(1,128)S(1)}', space=vmem, size = 0x200, scoped, tag = 'scoped memory for linear_depression_forward.1']
  %s0 = inlined_call_operand.vmem [shape: f32[8,32], index: 0, kind: input, shape index: {}]
  %s1 = inlined_call_operand.vmem [shape: f32[1,32], index: 1, kind: input, shape index: {}]
  %s2 = inlined_call_operand.<no memory space> [shape: f32[1,1], index: 2, kind: input, shape index: {}]
  %s3 = inlined_call_operand.vmem [shape: f32[8,2], index: 3, kind: output, shape index: {}]
  %s4 = sld [smem:[#allocation0]]
  $region22: #{linear_depression_forward.1} parent=0
    _
  %s6 = ssub.s32 1, %s4
  %s7 = scalar_select 0, %s6, %s4
  %v8 = vstv %s2
  %9 = vst [vmem:[#allocation2] sm:$0x1] %v8
  // Predicated region
  $region2: #{linear_depression_forward.1} parent=0 // pred_check
    _
  $region3: #{linear_depression_forward.1} parent=0 // pred_check_branch
    %11 = sbr.rel (0) target = $region5
  $region4: #{linear_depression_forward.1} parent=0 // pred_region
    _
  $region5: #{linear_depression_forward.1} parent=0 // pred_fallthru
    _
  // Predicated region
  $region6: #{linear_depression_forward.1} parent=0 // pred_check
    _
  $region7: #{linear_depression_forward.1} parent=0 // pred_check_branch
    %13 = sbr.rel (0) target = $region9
  $region8: #{linear_depression_forward.1} parent=0 // pred_region
    _
  $region9: #{linear_depression_forward.1} parent=0 // pred_fallthru
    _
  // Predicated region
  $region10: #{linear_depression_forward.1} parent=0 // pred_check
    _
  $region11: #{linear_depression_forward.1} parent=0 // pred_check_branch
    %15 = sbr.rel (0) target = $region13
  $region12: #{linear_depression_forward.1} parent=0 // pred_region
    _
  $region13: #{linear_depression_forward.1} parent=0 // pred_fallthru
    _
  %v16 = vld [vmem:[%s0] sm:$0xff]
  %v17 = vld [vmem:[%s1] sm:$0x1]
  %v19 = vperm.slane %v17, 0
  %v21 = vmul.f32 %v16, %v19
  %vm22 = vcmask 261120
  %v23 = vsel %vm22, %v21, 0.0
  %24 = vadd.xlane.f32.xlu0 %v23
  %v25 = vpop.xlane.xlu0 %24
  %v26 = vld [vmem:[#allocation2] sm:$0x1]
  %v28 = vperm.slane %v26, 0
  %v30 = vadd.f32 %v25, %v28
  %v31 = vxor.u32 %v30, 2147483648
  %v32 = vmul.f32 %v31, 1.442695
  %v33 = vpow.pop %v32
  %v34 = vadd.f32 %v33, 1.0
  %v35 = vrcp.pop %v34
  %v36 = vmul.f32 %v34, %v35
  %v37 = vsub.f32 1.0, %v36
  %v38 = vmul.f32 %v35, %v37
  %v39 = vadd.f32 %v35, %v38
  %vm40 = vweird.f32 %v34
  %vm41 = vweird.f32 %v35
  %vm42 = vmor %vm40, %vm41
  %v43 = vsel %vm42, %v35, %v39
  %v44 = vand.u32 2147483647, %v34
  %vm45 = vcmp.eq.f32.partialorder %v44, 8.507059e+37
  %v46 = vand.u32 %v34, 2147483648
  %v47 = vor.u32 1.1754944e-38, %v46
  %v48 = vsel %vm45, %v47, %v43
  %v49 = vmul.f32 1.0, %v48
  %51 = vrot.lane.b32.xlu0 %v49, 1
  %v52 = vpop.permute.xlu0 %51
  %vm54 = vcmask 15368
  %55 = vst.msk [vmem:[%s3] sm:$0xff] %vm54, %v52
  %v56 = vsub.f32 1.0, %v49
  %vm57 = vcmask 7168
  %58 = vst.msk [vmem:[%s3] sm:$0xff] %vm57, %v56
  // Predicated region
  $region14: #{linear_depression_forward.1} parent=0 // pred_check
    _
  $region15: #{linear_depression_forward.1} parent=0 // pred_check_branch
    %60 = sbr.rel (0) target = $region17
  $region16: #{linear_depression_forward.1} parent=0 // pred_region
    _
  $region17: #{linear_depression_forward.1} parent=0 // pred_fallthru
    _
  // Predicated region
  $region18: #{linear_depression_forward.1} parent=0 // pred_check
    _
  $region19: #{linear_depression_forward.1} parent=0 // pred_check_branch
    %62 = sbr.rel (0) target = $region21
  $region20: #{linear_depression_forward.1} parent=0 // pred_region
    _
  $region21: #{linear_depression_forward.1} parent=0 // pred_fallthru
    _

</llo_original>
